<compile_context>
chip_gen: v7x
topology: tpu7x:2x2x1
jax: 0.10.0
libtpu: 0.0.40
codegen_flags: <defaults>
</compile_context>

<pallas_src>
import functools

import jax
import jax.numpy as jnp
from jax.experimental import pallas as pl
from jax.experimental.pallas import tpu as pltpu

LANE = 128            # vreg lane width
ROW_ALIGN = 16        # batch-tile granularity (safe for f32 and packed bf16)
TILE_M_MAX = 2048     # max batch rows per grid step (~10 MiB VMEM w/ dbl buffers)
TILE_M_MIN = 512      # don't split tiles below this just to raise the grid
GRID_MIN_TARGET = 4   # aim for >=4 tiles at large batch (v7x 2 TCs x pipelining)


def _round_up(n, m):
    return (n + m - 1) // m * m


def _pad2d(a, rows, cols):
    return jnp.pad(a, ((0, rows - a.shape[0]), (0, cols - a.shape[1])))


def _discrim_kernel(n_inputs, activation, *refs):
    """refs = (x_1..x_n, w0, b0, w1, b1, ..., w_last, b_last, out)."""
    x_refs = refs[:n_inputs]
    wb = refs[n_inputs:-1]
    out_ref = refs[-1]
    n_linear = len(wb) // 2

    def act(h):  # element-wise stays f32 (v5e VPU/EUP have no bf16 path)
        return jnp.maximum(h, 0.0) if activation == "relu" else jnp.tanh(h)

    # torch.cat(x, dim=-1) folded in: concatenate the tiles in-register along
    # the lane axis (the concatenated activation never exists in HBM), then a
    # single fused layer-0 dot.  astype is a no-op if inputs are already bf16.
    pieces = [x_ref[...].astype(jnp.bfloat16) for x_ref in x_refs]
    h = pieces[0] if n_inputs == 1 else jnp.concatenate(pieces, axis=-1)

    for li in range(n_linear):
        w = wb[2 * li][...]        # bf16, pre-cast in prepare_discrim_params
        b = wb[2 * li + 1][...]    # f32
        h = jnp.dot(h.astype(jnp.bfloat16), w,
                    preferred_element_type=jnp.float32) + b
        if li < n_linear - 1:
            h = act(h)

    # Narrow, exact f32 store: same vreg/vst count as a 128-padded store but
    # 16x fewer HBM bytes for num_labels=8.
    out_ref[...] = h.astype(out_ref.dtype)


def init_discrim_params(key, x_dim, hidden_dim, num_labels, layers):
    """Params matching mlp(): Linear(x_dim,h), layers x Linear(h,h), Linear(h,num_labels)."""
    dims = [(x_dim, hidden_dim)] + [(hidden_dim, hidden_dim)] * layers + [
        (hidden_dim, num_labels)
    ]
    params = []
    for i, (din, dout) in enumerate(dims):
        kw, kb = jax.random.split(jax.random.fold_in(key, i))
        bound = 1.0 / float(din) ** 0.5
        w = jax.random.uniform(kw, (din, dout), jnp.float32, -bound, bound)
        b = jax.random.uniform(kb, (1, dout), jnp.float32, -bound, bound)
        params.append((w, b))
    return params


def prepare_discrim_params(params):
    """One-time layout prep (hoisted out of the per-call path per perf review).

    Pads hidden dims to the 128-lane width, leaves the final Linear un-padded
    (enables the narrow exact output store), and pre-casts MXU weights to
    bf16.  Biases stay f32.  Returns a flat tuple (w0, b0, w1, b1, ...).
    """
    n_linear = len(params)
    hidden = params[0][0].shape[1]
    h_pad = _round_up(hidden, LANE)
    flat = []
    for li, (w, b) in enumerate(params):
        rows = w.shape[0] if li == 0 else h_pad
        cols = w.shape[1] if li == n_linear - 1 else h_pad
        flat.append(_pad2d(jnp.asarray(w, jnp.float32), rows, cols).astype(jnp.bfloat16))
        flat.append(_pad2d(jnp.asarray(b, jnp.float32).reshape(1, -1), 1, cols))
    return tuple(flat)


@functools.partial(jax.jit, static_argnums=(0,))
def discrim_forward(activation, wb_flat, *xs):
    """Discrim forward: cat(xs, -1) -> MLP.  wb_flat from prepare_discrim_params."""
    assert activation in ("relu", "tanh")
    n_inputs = len(xs)
    batch = xs[0].shape[0]
    in_dims = [x.shape[1] for x in xs]
    assert all(x.shape[0] == batch for x in xs)
    assert sum(in_dims) == wb_flat[0].shape[0], "cat width must match layer-0 weight"
    num_labels = wb_flat[-2].shape[1]

    # ---- batch tiling: large tiles, minimal tail padding, grid>=2..4 at ----
    # ---- large batch so v7x's 2 TensorCores have independent work      ----
    grid = pl.cdiv(batch, TILE_M_MAX)
    grid = max(grid, min(GRID_MIN_TARGET, pl.cdiv(batch, TILE_M_MIN)))
    tile_m = _round_up(pl.cdiv(batch, grid), ROW_ALIGN)
    grid = pl.cdiv(batch, tile_m)
    padded_batch = grid * tile_m
    if padded_batch != batch:
        xs = tuple(jnp.pad(x, ((0, padded_batch - batch), (0, 0))) for x in xs)

    vmem = pltpu.MemorySpace.VMEM
    x_specs = [pl.BlockSpec((tile_m, d), lambda i: (i, 0), memory_space=vmem)
               for d in in_dims]
    wb_specs = [pl.BlockSpec(a.shape, lambda i: (0, 0), memory_space=vmem)
                for a in wb_flat]
    out_spec = pl.BlockSpec((tile_m, num_labels), lambda i: (i, 0),
                            memory_space=vmem)

    out = pl.pallas_call(
        functools.partial(_discrim_kernel, n_inputs, activation),
        out_shape=jax.ShapeDtypeStruct((padded_batch, num_labels), jnp.float32),
        grid=(grid,),
        in_specs=x_specs + wb_specs,
        out_specs=out_spec,
        compiler_params=pltpu.CompilerParams(
            dimension_semantics=(pltpu.PARALLEL,),   # batch tiles independent
            vmem_limit_bytes=32 * 1024 * 1024,       # fits v5e/v6e/v7x scoped VMEM
        ),
    )(*xs, *wb_flat)
    return out[:batch]


def _reference(params, activation, *xs, mxu_dtype=jnp.float32):
    x = jnp.concatenate(xs, axis=-1)
    h = x
    for i, (w, b) in enumerate(params):
        h = jnp.dot(h.astype(mxu_dtype), w.astype(mxu_dtype),
                    preferred_element_type=jnp.float32) + b
        if i < len(params) - 1:
            h = jnp.maximum(h, 0.0) if activation == "relu" else jnp.tanh(h)
    return h


if __name__ == "__main__":
    # Discrim(x_dim=32, hidden_dim=32, num_labels=8, layers=2, activation='relu')
    # forward(x1, x2) where x1, x2 each have feature dim 16 (cat -> 32).
    x_dim, hidden_dim, num_labels, layers = 32, 32, 8, 2
    key = jax.random.PRNGKey(0)
    kp, k1, k2 = jax.random.split(key, 3)
    params = init_discrim_params(kp, x_dim, hidden_dim, num_labels, layers)
    wb = prepare_discrim_params(params)   # one-time pad/split/cast (hoisted)

    # --- small batch ---------------------------------------------------------
    batch = 8
    x1 = jax.random.normal(k1, (batch, 16), jnp.float32)
    x2 = jax.random.normal(k2, (batch, 16), jnp.float32)
    out = jax.block_until_ready(discrim_forward("relu", wb, x1, x2))
    assert out.shape == (batch, num_labels)
    ref_b = _reference(params, "relu", x1, x2, mxu_dtype=jnp.bfloat16)
    ref_f = _reference(params, "relu", x1, x2, mxu_dtype=jnp.float32)
    assert jnp.allclose(out, ref_b, atol=3e-4, rtol=1e-3), "mismatch vs bf16-MXU reference"
    assert jnp.allclose(out, ref_f, atol=5e-2, rtol=5e-2), "mismatch vs f32 reference"

    # --- awkward batch (tail tiling: 300 pads to 304 rows, not 512) ----------
    batch2 = 300
    k3, k4 = jax.random.split(jax.random.fold_in(key, 7))
    y1 = jax.random.normal(k3, (batch2, 16), jnp.float32)
    y2 = jax.random.normal(k4, (batch2, 16), jnp.float32)
    out2 = jax.block_until_ready(discrim_forward("relu", wb, y1, y2))
    assert out2.shape == (batch2, num_labels)
    ref2 = _reference(params, "relu", y1, y2, mxu_dtype=jnp.bfloat16)
    assert jnp.allclose(out2, ref2, atol=3e-4, rtol=1e-3), "mismatch (tail-tiled batch)"

    # --- larger batch: exercises grid > 1 (multi-tile / 2-TC split path) -----
    batch3 = 1100
    k5, k6 = jax.random.split(jax.random.fold_in(key, 11))
    z1 = jax.random.normal(k5, (batch3, 16), jnp.float32)
    z2 = jax.random.normal(k6, (batch3, 16), jnp.float32)
    out3 = jax.block_until_ready(discrim_forward("relu", wb, z1, z2))
    assert out3.shape == (batch3, num_labels)
    ref3 = _reference(params, "relu", z1, z2, mxu_dtype=jnp.bfloat16)
    assert jnp.allclose(out3, ref3, atol=3e-4, rtol=1e-3), "mismatch (multi-tile batch)"

    # --- bf16 inputs: halves input DMA, no wrapper-side cast in the kernel ---
    out4 = jax.block_until_ready(
        discrim_forward("relu", wb, y1.astype(jnp.bfloat16), y2.astype(jnp.bfloat16)))
    ref4 = _reference(params, "relu", y1.astype(jnp.bfloat16), y2.astype(jnp.bfloat16),
                      mxu_dtype=jnp.bfloat16)
    assert jnp.allclose(out4, ref4, atol=3e-4, rtol=1e-3), "mismatch (bf16 inputs)"

    # --- tanh activation variant (loose tol: EUP tanh vs XLA tanh approx) ----
    out5 = jax.block_until_ready(discrim_forward("tanh", wb, x1, x2))
    ref5 = _reference(params, "tanh", x1, x2, mxu_dtype=jnp.bfloat16)
    assert jnp.allclose(out5, ref5, atol=1e-2, rtol=1e-2), "mismatch (tanh)"

    print("KERNEL_OK")
</pallas_src>

<mosaic_0001>
module attributes {stable_mosaic.version = 11 : i64} {
  func.func @_discrim_kernel(%arg0: i32, %arg1: memref<16x16xf32, #tpu.memory_space<vmem>>, %arg2: memref<16x16xf32, #tpu.memory_space<vmem>>, %arg3: memref<32x128xbf16, #tpu.memory_space<vmem>>, %arg4: memref<1x128xf32, #tpu.memory_space<vmem>>, %arg5: memref<128x128xbf16, #tpu.memory_space<vmem>>, %arg6: memref<1x128xf32, #tpu.memory_space<vmem>>, %arg7: memref<128x128xbf16, #tpu.memory_space<vmem>>, %arg8: memref<1x128xf32, #tpu.memory_space<vmem>>, %arg9: memref<128x8xbf16, #tpu.memory_space<vmem>>, %arg10: memref<1x8xf32, #tpu.memory_space<vmem>>, %arg11: memref<16x8xf32, #tpu.memory_space<vmem>>) attributes {dimension_semantics = [#tpu.dimension_semantics<parallel>], iteration_bounds = array<i64: 1>, scalar_prefetch = 0 : i64, scratch_operands = 0 : i64, tpu.core_type = #tpu.core_type<tc>, window_params = [{transform_indices = @transform_0, window_bounds = array<i64: 16, 16>}, {transform_indices = @transform_1, window_bounds = array<i64: 16, 16>}, {pipeline_mode = #tpu.pipeline_mode<synchronous>, transform_indices = @transform_2, window_bounds = array<i64: 32, 128>}, {pipeline_mode = #tpu.pipeline_mode<synchronous>, transform_indices = @transform_3, window_bounds = array<i64: 1, 128>}, {pipeline_mode = #tpu.pipeline_mode<synchronous>, transform_indices = @transform_4, window_bounds = array<i64: 128, 128>}, {pipeline_mode = #tpu.pipeline_mode<synchronous>, transform_indices = @transform_5, window_bounds = array<i64: 1, 128>}, {pipeline_mode = #tpu.pipeline_mode<synchronous>, transform_indices = @transform_6, window_bounds = array<i64: 128, 128>}, {pipeline_mode = #tpu.pipeline_mode<synchronous>, transform_indices = @transform_7, window_bounds = array<i64: 1, 128>}, {pipeline_mode = #tpu.pipeline_mode<synchronous>, transform_indices = @transform_8, window_bounds = array<i64: 128, 8>}, {pipeline_mode = #tpu.pipeline_mode<synchronous>, transform_indices = @transform_9, window_bounds = array<i64: 1, 8>}, {transform_indices = @transform_10, window_bounds = array<i64: 16, 8>}]} {
    %c0 = arith.constant 0 : index
    %c0_0 = arith.constant 0 : index
    %0 = vector.load %arg1[%c0, %c0_0] : memref<16x16xf32, #tpu.memory_space<vmem>>, vector<16x16xf32>
    %1 = arith.truncf %0 : vector<16x16xf32> to vector<16x16xbf16>
    %c0_1 = arith.constant 0 : index
    %c0_2 = arith.constant 0 : index
    %2 = vector.load %arg2[%c0_1, %c0_2] : memref<16x16xf32, #tpu.memory_space<vmem>>, vector<16x16xf32>
    %3 = arith.truncf %2 : vector<16x16xf32> to vector<16x16xbf16>
    %4 = tpu.concatenate %1, %3 in 1 : vector<16x16xbf16>, vector<16x16xbf16> -> vector<16x32xbf16>
    %c0_3 = arith.constant 0 : index
    %c0_4 = arith.constant 0 : index
    %5 = vector.load %arg3[%c0_3, %c0_4] : memref<32x128xbf16, #tpu.memory_space<vmem>>, vector<32x128xbf16>
    %c0_5 = arith.constant 0 : index
    %c0_6 = arith.constant 0 : index
    %6 = vector.load %arg4[%c0_5, %c0_6] : memref<1x128xf32, #tpu.memory_space<vmem>>, vector<1x128xf32>
    %cst = arith.constant dense<0.000000e+00> : vector<16x128xf32>
    %7 = tpu.matmul %4, %5, %cst {dimension_numbers = #tpu.dot_dimension_numbers<[1], [0], [0], [1], [0, 0, 1, 1], [], []>} : vector<16x32xbf16>, vector<32x128xbf16>, vector<16x128xf32> -> vector<16x128xf32>
    %8 = vector.broadcast %6 : vector<1x128xf32> to vector<16x128xf32>
    %9 = arith.addf %7, %8 : vector<16x128xf32>
    %cst_7 = arith.constant 0.000000e+00 : f32
    %10 = vector.broadcast %cst_7 : f32 to vector<16x128xf32>
    %11 = arith.maximumf %9, %10 : vector<16x128xf32>
    %c0_8 = arith.constant 0 : index
    %c0_9 = arith.constant 0 : index
    %12 = vector.load %arg5[%c0_8, %c0_9] : memref<128x128xbf16, #tpu.memory_space<vmem>>, vector<128x128xbf16>
    %c0_10 = arith.constant 0 : index
    %c0_11 = arith.constant 0 : index
    %13 = vector.load %arg6[%c0_10, %c0_11] : memref<1x128xf32, #tpu.memory_space<vmem>>, vector<1x128xf32>
    %14 = arith.truncf %11 : vector<16x128xf32> to vector<16x128xbf16>
    %cst_12 = arith.constant dense<0.000000e+00> : vector<16x128xf32>
    %15 = tpu.matmul %14, %12, %cst_12 {dimension_numbers = #tpu.dot_dimension_numbers<[1], [0], [0], [1], [0, 0, 1, 1], [], []>} : vector<16x128xbf16>, vector<128x128xbf16>, vector<16x128xf32> -> vector<16x128xf32>
    %16 = vector.broadcast %13 : vector<1x128xf32> to vector<16x128xf32>
    %17 = arith.addf %15, %16 : vector<16x128xf32>
    %cst_13 = arith.constant 0.000000e+00 : f32
    %18 = vector.broadcast %cst_13 : f32 to vector<16x128xf32>
    %19 = arith.maximumf %17, %18 : vector<16x128xf32>
    %c0_14 = arith.constant 0 : index
    %c0_15 = arith.constant 0 : index
    %20 = vector.load %arg7[%c0_14, %c0_15] : memref<128x128xbf16, #tpu.memory_space<vmem>>, vector<128x128xbf16>
    %c0_16 = arith.constant 0 : index
    %c0_17 = arith.constant 0 : index
    %21 = vector.load %arg8[%c0_16, %c0_17] : memref<1x128xf32, #tpu.memory_space<vmem>>, vector<1x128xf32>
    %22 = arith.truncf %19 : vector<16x128xf32> to vector<16x128xbf16>
    %cst_18 = arith.constant dense<0.000000e+00> : vector<16x128xf32>
    %23 = tpu.matmul %22, %20, %cst_18 {dimension_numbers = #tpu.dot_dimension_numbers<[1], [0], [0], [1], [0, 0, 1, 1], [], []>} : vector<16x128xbf16>, vector<128x128xbf16>, vector<16x128xf32> -> vector<16x128xf32>
    %24 = vector.broadcast %21 : vector<1x128xf32> to vector<16x128xf32>
    %25 = arith.addf %23, %24 : vector<16x128xf32>
    %cst_19 = arith.constant 0.000000e+00 : f32
    %26 = vector.broadcast %cst_19 : f32 to vector<16x128xf32>
    %27 = arith.maximumf %25, %26 : vector<16x128xf32>
    %c0_20 = arith.constant 0 : index
    %c0_21 = arith.constant 0 : index
    %28 = vector.load %arg9[%c0_20, %c0_21] : memref<128x8xbf16, #tpu.memory_space<vmem>>, vector<128x8xbf16>
    %c0_22 = arith.constant 0 : index
    %c0_23 = arith.constant 0 : index
    %29 = vector.load %arg10[%c0_22, %c0_23] : memref<1x8xf32, #tpu.memory_space<vmem>>, vector<1x8xf32>
    %30 = arith.truncf %27 : vector<16x128xf32> to vector<16x128xbf16>
    %cst_24 = arith.constant dense<0.000000e+00> : vector<16x8xf32>
    %31 = tpu.matmul %30, %28, %cst_24 {dimension_numbers = #tpu.dot_dimension_numbers<[1], [0], [0], [1], [0, 0, 1, 1], [], []>} : vector<16x128xbf16>, vector<128x8xbf16>, vector<16x8xf32> -> vector<16x8xf32>
    %32 = vector.broadcast %29 : vector<1x8xf32> to vector<16x8xf32>
    %33 = arith.addf %31, %32 : vector<16x8xf32>
    %c0_25 = arith.constant 0 : index
    %c0_26 = arith.constant 0 : index
    %34 = vector.load %arg11[%c0_25, %c0_26] : memref<16x8xf32, #tpu.memory_space<vmem>>, vector<16x8xf32>
    tpu.vector_store %arg11[%c0_25, %c0_26], %33 {strides = array<i32>} : memref<16x8xf32, #tpu.memory_space<vmem>>, vector<16x8xf32>,
    return
  }
  func.func @transform_0(%arg0: i32) -> (i32, i32) {
    %c0_i32 = arith.constant 0 : i32
    %c0_i32_0 = arith.constant 0 : i32
    return %arg0, %c0_i32 : i32, i32
  }
  func.func @transform_1(%arg0: i32) -> (i32, i32) {
    %c0_i32 = arith.constant 0 : i32
    %c0_i32_0 = arith.constant 0 : i32
    return %arg0, %c0_i32 : i32, i32
  }
  func.func @transform_2(%arg0: i32) -> (i32, i32) {
    %c0_i32 = arith.constant 0 : i32
    %c0_i32_0 = arith.constant 0 : i32
    %c0_i32_1 = arith.constant 0 : i32
    return %c0_i32, %c0_i32_0 : i32, i32
  }
  func.func @transform_3(%arg0: i32) -> (i32, i32) {
    %c0_i32 = arith.constant 0 : i32
    %c0_i32_0 = arith.constant 0 : i32
    %c0_i32_1 = arith.constant 0 : i32
    return %c0_i32, %c0_i32_0 : i32, i32
  }
  func.func @transform_4(%arg0: i32) -> (i32, i32) {
    %c0_i32 = arith.constant 0 : i32
    %c0_i32_0 = arith.constant 0 : i32
    %c0_i32_1 = arith.constant 0 : i32
    return %c0_i32, %c0_i32_0 : i32, i32
  }
  func.func @transform_5(%arg0: i32) -> (i32, i32) {
    %c0_i32 = arith.constant 0 : i32
    %c0_i32_0 = arith.constant 0 : i32
    %c0_i32_1 = arith.constant 0 : i32
    return %c0_i32, %c0_i32_0 : i32, i32
  }
  func.func @transform_6(%arg0: i32) -> (i32, i32) {
    %c0_i32 = arith.constant 0 : i32
    %c0_i32_0 = arith.constant 0 : i32
    %c0_i32_1 = arith.constant 0 : i32
    return %c0_i32, %c0_i32_0 : i32, i32
  }
  func.func @transform_7(%arg0: i32) -> (i32, i32) {
    %c0_i32 = arith.constant 0 : i32
    %c0_i32_0 = arith.constant 0 : i32
    %c0_i32_1 = arith.constant 0 : i32
    return %c0_i32, %c0_i32_0 : i32, i32
  }
  func.func @transform_8(%arg0: i32) -> (i32, i32) {
    %c0_i32 = arith.constant 0 : i32
    %c0_i32_0 = arith.constant 0 : i32
    %c0_i32_1 = arith.constant 0 : i32
    return %c0_i32, %c0_i32_0 : i32, i32
  }
  func.func @transform_9(%arg0: i32) -> (i32, i32) {
    %c0_i32 = arith.constant 0 : i32
    %c0_i32_0 = arith.constant 0 : i32
    %c0_i32_1 = arith.constant 0 : i32
    return %c0_i32, %c0_i32_0 : i32, i32
  }
  func.func @transform_10(%arg0: i32) -> (i32, i32) {
    %c0_i32 = arith.constant 0 : i32
    %c0_i32_0 = arith.constant 0 : i32
    return %arg0, %c0_i32 : i32, i32
  }
}

</mosaic_0001>

<llo_original>
// kernel: discrim_forward.1
$region0: #{discrim_forward.1}
  #allocation0 [shape = 'u32[]', space=smem, size = 0x4, offset = 0x4, fixed_abs, tag = 'smem constant byte address 0x4 - core index']
  #allocation1 [shape = 'u32[144,128]{1,0:T(1,128)}', space=vmem, size = 0x12000, scoped, tag = 'internal scratch']
  %s0 = inlined_call_operand.vmem [shape: f32[16,16], index: 0, kind: input, shape index: {}]
  %s1 = inlined_call_operand.vmem [shape: f32[16,16], index: 1, kind: input, shape index: {}]
  %s2 = inlined_call_operand.hbm [shape: bf16[32,128], index: 2, kind: input, shape index: {}]
  %s3 = inlined_call_operand.hbm [shape: f32[1,128], index: 3, kind: input, shape index: {}]
  %s4 = inlined_call_operand.vmem [shape: bf16[128,128], index: 4, kind: input, shape index: {}]
  %s5 = inlined_call_operand.hbm [shape: f32[1,128], index: 5, kind: input, shape index: {}]
  %s6 = inlined_call_operand.vmem [shape: bf16[128,128], index: 6, kind: input, shape index: {}]
  %s7 = inlined_call_operand.hbm [shape: f32[1,128], index: 7, kind: input, shape index: {}]
  %s8 = inlined_call_operand.vmem [shape: bf16[128,8], index: 8, kind: input, shape index: {}]
  %s9 = inlined_call_operand.hbm [shape: f32[1,8], index: 9, kind: input, shape index: {}]
  %s10 = inlined_call_operand.vmem [shape: f32[16,8], index: 10, kind: output, shape index: {}]
  %s11 = sld [smem:[#allocation0]]
  $region70: #{discrim_forward.1} parent=0
    _
  %s13 = ssub.s32 1, %s11
  %s14 = scalar_select 0, %s13, %s11
  $region1: #{discrim_forward.1} parent=0
    #allocation2 [shape = 'u8[8192]{0}', space=vmem, size = 0x2000, scoped, tag = 'input window, operand 2, single buffered']
    #allocation3 [shape = 's32[1]{0}', space=sflag, size = 0x4, scoped, tag = 'scoped memory for discrim_forward.1']
    #allocation4 [shape = 'u8[512]{0}', space=vmem, size = 0x400, scoped, tag = 'input window, operand 3, single buffered']
    #allocation5 [shape = 's32[1]{0}', space=sflag, size = 0x4, scoped, tag = 'scoped memory for discrim_forward.1']
    #allocation6 [shape = 'u8[512]{0}', space=vmem, size = 0x400, scoped, tag = 'input window, operand 5, single buffered']
    #allocation7 [shape = 'u8[512]{0}', space=vmem, size = 0x400, scoped, tag = 'input window, operand 7, single buffered']
    #allocation8 [shape = 's32[1]{0}', space=sflag, size = 0x4, scoped, tag = 'scoped memory for discrim_forward.1']
    #allocation9 [shape = 'u8[512]{0}', space=vmem, size = 0x400, scoped, tag = 'input window, operand 9, single buffered']
    %15 = vsyncpa [#allocation3], 0
    %16 = vsyncpa [#allocation5], 0
    %17 = vsyncpa [#allocation8], 0
    // Predicated region
    $region2: #{discrim_forward.1} parent=1 // pred_check
      _
    $region3: #{discrim_forward.1} parent=1 // pred_check_branch
      %19 = sbr.rel (0) target = $region5
    $region4: #{discrim_forward.1} parent=1 // pred_region
      _
    $region5: #{discrim_forward.1} parent=1 // pred_fallthru
      _
    // Predicated region
    $region6: #{discrim_forward.1} parent=1 // pred_check
      _
    $region7: #{discrim_forward.1} parent=1 // pred_check_branch
      %21 = sbr.rel (0) target = $region9
    $region8: #{discrim_forward.1} parent=1 // pred_region
      _
    $region9: #{discrim_forward.1} parent=1 // pred_fallthru
      _
    // Predicated region
    $region10: #{discrim_forward.1} parent=1 // pred_check
      _
    $region11: #{discrim_forward.1} parent=1 // pred_check_branch
      %23 = sbr.rel (0) target = $region13
    $region12: #{discrim_forward.1} parent=1 // pred_region
      %s25 = ssub.s32 256, 256
      %26 = vsyncadd [#allocation3], %s25
      %s27 = sshll.u32 [#allocation2], 4
      %s28 = int_to_ptr.vmem [resolvable:$true] %s27
      %33 = dma.hbm_to_vmem [thread:$0]  %s2, 256, %s28, [#allocation3], 64, 64, 4
    $region13: #{discrim_forward.1} parent=1 // pred_fallthru
      _
    // Predicated region
    $region14: #{discrim_forward.1} parent=1 // pred_check
      _
    $region15: #{discrim_forward.1} parent=1 // pred_check_branch
      %35 = sbr.rel (0) target = $region17
    $region16: #{discrim_forward.1} parent=1 // pred_region
      %s37 = ssub.s32 16, 16
      %38 = vsyncadd [#allocation5], %s37
      %s40 = sshll.u32 [#allocation4], 4
      %s41 = int_to_ptr.vmem [resolvable:$true] %s40
      %43 = dma.hbm_to_vmem [thread:$0]  %s3, 16, %s41, [#allocation5]
    $region17: #{discrim_forward.1} parent=1 // pred_fallthru
      _
    // Predicated region
    $region18: #{discrim_forward.1} parent=1 // pred_check
      _
    $region19: #{discrim_forward.1} parent=1 // pred_check_branch
      %45 = sbr.rel (0) target = $region21
    $region20: #{discrim_forward.1} parent=1 // pred_region
      _
    $region21: #{discrim_forward.1} parent=1 // pred_fallthru
      _
    // Predicated region
    $region22: #{discrim_forward.1} parent=1 // pred_check
      _
    $region23: #{discrim_forward.1} parent=1 // pred_check_branch
      %47 = sbr.rel (0) target = $region25
    $region24: #{discrim_forward.1} parent=1 // pred_region
      %s49 = ssub.s32 16, 16
      %50 = vsyncadd [#allocation5], %s49
      %s52 = sshll.u32 [#allocation6], 4
      %s53 = int_to_ptr.vmem [resolvable:$true] %s52
      %55 = dma.hbm_to_vmem [thread:$0]  %s5, 16, %s53, [#allocation5]
    $region25: #{discrim_forward.1} parent=1 // pred_fallthru
      _
    // Predicated region
    $region26: #{discrim_forward.1} parent=1 // pred_check
      _
    $region27: #{discrim_forward.1} parent=1 // pred_check_branch
      %57 = sbr.rel (0) target = $region29
    $region28: #{discrim_forward.1} parent=1 // pred_region
      _
    $region29: #{discrim_forward.1} parent=1 // pred_fallthru
      _
    // Predicated region
    $region30: #{discrim_forward.1} parent=1 // pred_check
      _
    $region31: #{discrim_forward.1} parent=1 // pred_check_branch
      %59 = sbr.rel (0) target = $region33
    $region32: #{discrim_forward.1} parent=1 // pred_region
      %s61 = ssub.s32 16, 16
      %62 = vsyncadd [#allocation8], %s61
      %s64 = sshll.u32 [#allocation7], 4
      %s65 = int_to_ptr.vmem [resolvable:$true] %s64
      %67 = dma.hbm_to_vmem [thread:$0]  %s7, 16, %s65, [#allocation8]
    $region33: #{discrim_forward.1} parent=1 // pred_fallthru
      _
    // Predicated region
    $region34: #{discrim_forward.1} parent=1 // pred_check
      _
    $region35: #{discrim_forward.1} parent=1 // pred_check_branch
      %69 = sbr.rel (0) target = $region37
    $region36: #{discrim_forward.1} parent=1 // pred_region
      _
    $region37: #{discrim_forward.1} parent=1 // pred_fallthru
      _
    // Predicated region
    $region38: #{discrim_forward.1} parent=1 // pred_check
      _
    $region39: #{discrim_forward.1} parent=1 // pred_check_branch
      %71 = sbr.rel (0) target = $region41
    $region40: #{discrim_forward.1} parent=1 // pred_region
      %s73 = ssub.s32 16, 16
      %74 = vsyncadd [#allocation8], %s73
      %s76 = sshll.u32 [#allocation9], 4
      %s77 = int_to_ptr.vmem [resolvable:$true] %s76
      %79 = dma.hbm_to_vmem [thread:$0]  %s9, 16, %s77, [#allocation8]
    $region41: #{discrim_forward.1} parent=1 // pred_fallthru
      _
    // Predicated region
    $region42: #{discrim_forward.1} parent=1 // pred_check
      _
    $region43: #{discrim_forward.1} parent=1 // pred_check_branch
      %81 = sbr.rel (0) target = $region45
    $region44: #{discrim_forward.1} parent=1 // pred_region
      %82 = dma.done [#allocation3], 256
    $region45: #{discrim_forward.1} parent=1 // pred_fallthru
      _
    // Predicated region
    $region46: #{discrim_forward.1} parent=1 // pred_check
      _
    $region47: #{discrim_forward.1} parent=1 // pred_check_branch
      %84 = sbr.rel (0) target = $region49
    $region48: #{discrim_forward.1} parent=1 // pred_region
      %85 = dma.done [#allocation5], 16
    $region49: #{discrim_forward.1} parent=1 // pred_fallthru
      _
    // Predicated region
    $region50: #{discrim_forward.1} parent=1 // pred_check
      _
    $region51: #{discrim_forward.1} parent=1 // pred_check_branch
      %87 = sbr.rel (0) target = $region53
    $region52: #{discrim_forward.1} parent=1 // pred_region
      %88 = dma.done [#allocation5], 16
    $region53: #{discrim_forward.1} parent=1 // pred_fallthru
      _
    // Predicated region
    $region54: #{discrim_forward.1} parent=1 // pred_check
      _
    $region55: #{discrim_forward.1} parent=1 // pred_check_branch
      %90 = sbr.rel (0) target = $region57
    $region56: #{discrim_forward.1} parent=1 // pred_region
      %91 = dma.done [#allocation8], 16
    $region57: #{discrim_forward.1} parent=1 // pred_fallthru
      _
    // Predicated region
    $region58: #{discrim_forward.1} parent=1 // pred_check
      _
    $region59: #{discrim_forward.1} parent=1 // pred_check_branch
      %93 = sbr.rel (0) target = $region61
    $region60: #{discrim_forward.1} parent=1 // pred_region
      %94 = dma.done [#allocation8], 16
    $region61: #{discrim_forward.1} parent=1 // pred_fallthru
      _
    %v96 = vld [vmem:[%s0] sm:$0xff]
    %v97 = vld [vmem:[%s0 + $0x8] sm:$0xff]
    %v98 = vpack.c.bf16 %v97, %v96
    %v99 = vld [vmem:[%s1] sm:$0xff]
    %v100 = vld [vmem:[%s1 + $0x8] sm:$0xff]
    %v101 = vpack.c.bf16 %v100, %v99
    %103 = vrot.lane.b32.xlu0 %v101, 16
    %v104 = vpop.permute.xlu0 %103
    %vm105 = vcmask 130048
    %v108 = vsel %vm105, %v98, %v104
    %v109 = vld [vmem:[#allocation2] sm:$0xf]
    %v110 = vld [vmem:[#allocation2 + $0x4] sm:$0xf]
    %v111 = vld [vmem:[#allocation2 + $0x8] sm:$0xf]
    %v112 = vld [vmem:[#allocation2 + $0xc] sm:$0xf]
    %v113 = vld [vmem:[#allocation4] sm:$0x1]
    %v115 = vlaneseq
    %v116 = vshrl.u32 %v115, 7
    %v117 = vsub.s32 0, %v116
    %v118 = vrot.slane %v113, %v117
    %v124 = vunpack.c.l.b16 %v109
    %v125 = vunpack.c.l.b16 %v110
    %v126 = vunpack.c.l.b16 %v111
    %v127 = vunpack.c.l.b16 %v112
    %v128 = vpack.c.b16 %v125, %v124
    %v129 = vpack.c.b16 %v127, %v126
    %vm132 = vcmask 261120
    %v133 = vsel %vm132, %v108, 0
    %135 = vmatprep.subr.bf16.mxu0 0
    %136 = vmatpush1.bf16.msra.mxu0 %v128
    %137 = vmatprep.subr.bf16.mxu0 0
    %138 = vmatpush1.bf16.msra.mxu0 %v129
    %139 = vmatprep.subr.bf16.mxu0 0
    %140 = vmatpush1.bf16.msra.mxu0 0
    %141 = vmatprep.subr.bf16.mxu0 0
    %142 = vmatpush1.bf16.msra.mxu0 0
    %143 = vmatprep.subr.bf16.mxu0 0
    %144 = vmatpush1.bf16.msra.mxu0 0
    %145 = vmatprep.subr.bf16.mxu0 0
    %146 = vmatpush1.bf16.msra.mxu0 0
    %147 = vmatprep.subr.bf16.mxu0 0
    %148 = vmatpush1.bf16.msra.mxu0 0
    %149 = vmatprep.subr.bf16.mxu0 0
    %150 = vmatpush1.bf16.msra.mxu0 0
    %151 = vmatprep.subr.bf16.mxu0 0
    %152 = vmatpush1.bf16.msra.mxu0 0
    %153 = vmatprep.subr.bf16.mxu0 0
    %154 = vmatpush1.bf16.msra.mxu0 0
    %155 = vmatprep.subr.bf16.mxu0 0
    %156 = vmatpush1.bf16.msra.mxu0 0
    %157 = vmatprep.subr.bf16.mxu0 0
    %158 = vmatpush1.bf16.msra.mxu0 0
    %159 = vmatprep.subr.bf16.mxu0 0
    %160 = vmatpush1.bf16.msra.mxu0 0
    %161 = vmatprep.subr.bf16.mxu0 0
    %162 = vmatpush1.bf16.msra.mxu0 0
    %163 = vmatprep.subr.bf16.mxu0 0
    %164 = vmatpush1.bf16.msra.mxu0 0
    %165 = vmatprep.subr.bf16.mxu0 0
    %166 = vmatpush1.bf16.msra.mxu0 0
    %167 = vmatprep.mubr.bf16.mxu0 0
    %168 = vmatmul.mubr.bf16.gmra.mrb[0].mxu0 %v133
    %v169 = vpop.f32.mrb[0].mxu0
    %v170 = vadd.f32 %v118, %v169
    %v171 = vpop.f32.mrb[0].mxu0
    %v172 = vpop.f32.mrb[0].mxu0
    %v173 = vadd.f32 %v118, %v172
    %v174 = vpop.f32.mrb[0].mxu0
    %175 = vdwg.mxu0
    %v176 = vmax.f32 %v170, 0.0
    %v177 = vmax.f32 %v173, 0.0
    %v178 = vld [vmem:[%s4] sm:$0xf]
    %v179 = vld [vmem:[%s4 + $0x4] sm:$0xf]
    %v180 = vld [vmem:[%s4 + $0x8] sm:$0xf]
    %v181 = vld [vmem:[%s4 + $0xc] sm:$0xf]
    %v182 = vld [vmem:[%s4 + $0x10] sm:$0xf]
    %v183 = vld [vmem:[%s4 + $0x14] sm:$0xf]
    %v184 = vld [vmem:[%s4 + $0x18] sm:$0xf]
    %v185 = vld [vmem:[%s4 + $0x1c] sm:$0xf]
    %v186 = vld [vmem:[%s4 + $0x20] sm:$0xf]
    %v187 = vld [vmem:[%s4 + $0x24] sm:$0xf]
    %v188 = vld [vmem:[%s4 + $0x28] sm:$0xf]
    %v189 = vld [vmem:[%s4 + $0x2c] sm:$0xf]
    %v190 = vld [vmem:[%s4 + $0x30] sm:$0xf]
    %v191 = vld [vmem:[%s4 + $0x34] sm:$0xf]
    %v192 = vld [vmem:[%s4 + $0x38] sm:$0xf]
    %v193 = vld [vmem:[%s4 + $0x3c] sm:$0xf]
    %v194 = vld [vmem:[#allocation6] sm:$0x1]
    %v195 = vpack.c.bf16 %v177, %v176
    %v197 = vlaneseq
    %v198 = vshrl.u32 %v197, 7
    %v199 = vsub.s32 0, %v198
    %v200 = vrot.slane %v194, %v199
    %v218 = vunpack.c.l.b16 %v178
    %v219 = vunpack.c.l.b16 %v179
    %v220 = vunpack.c.l.b16 %v180
    %v221 = vunpack.c.l.b16 %v181
    %v222 = vunpack.c.l.b16 %v182
    %v223 = vunpack.c.l.b16 %v183
    %v224 = vunpack.c.l.b16 %v184
    %v225 = vunpack.c.l.b16 %v185
    %v226 = vunpack.c.l.b16 %v186
    %v227 = vunpack.c.l.b16 %v187
    %v228 = vunpack.c.l.b16 %v188
    %v229 = vunpack.c.l.b16 %v189
    %v230 = vunpack.c.l.b16 %v190
    %v231 = vunpack.c.l.b16 %v191
    %v232 = vunpack.c.l.b16 %v192
    %v233 = vunpack.c.l.b16 %v193
    %v234 = vpack.c.b16 %v219, %v218
    %v235 = vpack.c.b16 %v221, %v220
    %v236 = vpack.c.b16 %v223, %v222
    %v237 = vpack.c.b16 %v225, %v224
    %v238 = vpack.c.b16 %v227, %v226
    %v239 = vpack.c.b16 %v229, %v228
    %v240 = vpack.c.b16 %v231, %v230
    %v241 = vpack.c.b16 %v233, %v232
    %250 = vmatprep.subr.bf16.mxu0 0
    %251 = vmatpush1.bf16.msra.mxu0 %v234
    %252 = vmatprep.subr.bf16.mxu0 0
    %253 = vmatpush1.bf16.msra.mxu0 %v235
    %254 = vmatprep.subr.bf16.mxu0 0
    %255 = vmatpush1.bf16.msra.mxu0 %v236
    %256 = vmatprep.subr.bf16.mxu0 0
    %257 = vmatpush1.bf16.msra.mxu0 %v237
    %258 = vmatprep.subr.bf16.mxu0 0
    %259 = vmatpush1.bf16.msra.mxu0 %v238
    %260 = vmatprep.subr.bf16.mxu0 0
    %261 = vmatpush1.bf16.msra.mxu0 %v239
    %262 = vmatprep.subr.bf16.mxu0 0
    %263 = vmatpush1.bf16.msra.mxu0 %v240
    %264 = vmatprep.subr.bf16.mxu0 0
    %265 = vmatpush1.bf16.msra.mxu0 %v241
    %266 = vmatprep.subr.bf16.mxu0 0
    %267 = vmatpush1.bf16.msra.mxu0 0
    %268 = vmatprep.subr.bf16.mxu0 0
    %269 = vmatpush1.bf16.msra.mxu0 0
    %270 = vmatprep.subr.bf16.mxu0 0
    %271 = vmatpush1.bf16.msra.mxu0 0
    %272 = vmatprep.subr.bf16.mxu0 0
    %273 = vmatpush1.bf16.msra.mxu0 0
    %274 = vmatprep.subr.bf16.mxu0 0
    %275 = vmatpush1.bf16.msra.mxu0 0
    %276 = vmatprep.subr.bf16.mxu0 0
    %277 = vmatpush1.bf16.msra.mxu0 0
    %278 = vmatprep.subr.bf16.mxu0 0
    %279 = vmatpush1.bf16.msra.mxu0 0
    %280 = vmatprep.subr.bf16.mxu0 0
    %281 = vmatpush1.bf16.msra.mxu0 0
    %282 = vmatprep.mubr.bf16.mxu0 0
    %283 = vmatmul.mubr.bf16.gmra.mrb[0].mxu0 %v195
    %v284 = vpop.f32.mrb[0].mxu0
    %v285 = vadd.f32 %v200, %v284
    %v286 = vpop.f32.mrb[0].mxu0
    %v287 = vpop.f32.mrb[0].mxu0
    %v288 = vadd.f32 %v200, %v287
    %v289 = vpop.f32.mrb[0].mxu0
    %290 = vdwg.mxu0
    %v291 = vmax.f32 %v285, 0.0
    %v292 = vmax.f32 %v288, 0.0
    %v293 = vld [vmem:[%s6] sm:$0xf]
    %v294 = vld [vmem:[%s6 + $0x4] sm:$0xf]
    %v295 = vld [vmem:[%s6 + $0x8] sm:$0xf]
    %v296 = vld [vmem:[%s6 + $0xc] sm:$0xf]
    %v297 = vld [vmem:[%s6 + $0x10] sm:$0xf]
    %v298 = vld [vmem:[%s6 + $0x14] sm:$0xf]
    %v299 = vld [vmem:[%s6 + $0x18] sm:$0xf]
    %v300 = vld [vmem:[%s6 + $0x1c] sm:$0xf]
    %v301 = vld [vmem:[%s6 + $0x20] sm:$0xf]
    %v302 = vld [vmem:[%s6 + $0x24] sm:$0xf]
    %v303 = vld [vmem:[%s6 + $0x28] sm:$0xf]
    %v304 = vld [vmem:[%s6 + $0x2c] sm:$0xf]
    %v305 = vld [vmem:[%s6 + $0x30] sm:$0xf]
    %v306 = vld [vmem:[%s6 + $0x34] sm:$0xf]
    %v307 = vld [vmem:[%s6 + $0x38] sm:$0xf]
    %v308 = vld [vmem:[%s6 + $0x3c] sm:$0xf]
    %v309 = vld [vmem:[#allocation7] sm:$0x1]
    %v310 = vpack.c.bf16 %v292, %v291
    %v312 = vlaneseq
    %v313 = vshrl.u32 %v312, 7
    %v314 = vsub.s32 0, %v313
    %v315 = vrot.slane %v309, %v314
    %v333 = vunpack.c.l.b16 %v293
    %v334 = vunpack.c.l.b16 %v294
    %v335 = vunpack.c.l.b16 %v295
    %v336 = vunpack.c.l.b16 %v296
    %v337 = vunpack.c.l.b16 %v297
    %v338 = vunpack.c.l.b16 %v298
    %v339 = vunpack.c.l.b16 %v299
    %v340 = vunpack.c.l.b16 %v300
    %v341 = vunpack.c.l.b16 %v301
    %v342 = vunpack.c.l.b16 %v302
    %v343 = vunpack.c.l.b16 %v303
    %v344 = vunpack.c.l.b16 %v304
    %v345 = vunpack.c.l.b16 %v305
    %v346 = vunpack.c.l.b16 %v306
    %v347 = vunpack.c.l.b16 %v307
    %v348 = vunpack.c.l.b16 %v308
    %v349 = vpack.c.b16 %v334, %v333
    %v350 = vpack.c.b16 %v336, %v335
    %v351 = vpack.c.b16 %v338, %v337
    %v352 = vpack.c.b16 %v340, %v339
    %v353 = vpack.c.b16 %v342, %v341
    %v354 = vpack.c.b16 %v344, %v343
    %v355 = vpack.c.b16 %v346, %v345
    %v356 = vpack.c.b16 %v348, %v347
    %365 = vmatprep.subr.bf16.mxu0 0
    %366 = vmatpush1.bf16.msra.mxu0 %v349
    %367 = vmatprep.subr.bf16.mxu0 0
    %368 = vmatpush1.bf16.msra.mxu0 %v350
    %369 = vmatprep.subr.bf16.mxu0 0
    %370 = vmatpush1.bf16.msra.mxu0 %v351
    %371 = vmatprep.subr.bf16.mxu0 0
    %372 = vmatpush1.bf16.msra.mxu0 %v352
    %373 = vmatprep.subr.bf16.mxu0 0
    %374 = vmatpush1.bf16.msra.mxu0 %v353
    %375 = vmatprep.subr.bf16.mxu0 0
    %376 = vmatpush1.bf16.msra.mxu0 %v354
    %377 = vmatprep.subr.bf16.mxu0 0
    %378 = vmatpush1.bf16.msra.mxu0 %v355
    %379 = vmatprep.subr.bf16.mxu0 0
    %380 = vmatpush1.bf16.msra.mxu0 %v356
    %381 = vmatprep.subr.bf16.mxu0 0
    %382 = vmatpush1.bf16.msra.mxu0 0
    %383 = vmatprep.subr.bf16.mxu0 0
    %384 = vmatpush1.bf16.msra.mxu0 0
    %385 = vmatprep.subr.bf16.mxu0 0
    %386 = vmatpush1.bf16.msra.mxu0 0
    %387 = vmatprep.subr.bf16.mxu0 0
    %388 = vmatpush1.bf16.msra.mxu0 0
    %389 = vmatprep.subr.bf16.mxu0 0
    %390 = vmatpush1.bf16.msra.mxu0 0
    %391 = vmatprep.subr.bf16.mxu0 0
    %392 = vmatpush1.bf16.msra.mxu0 0
    %393 = vmatprep.subr.bf16.mxu0 0
    %394 = vmatpush1.bf16.msra.mxu0 0
    %395 = vmatprep.subr.bf16.mxu0 0
    %396 = vmatpush1.bf16.msra.mxu0 0
    %397 = vmatprep.mubr.bf16.mxu0 0
    %398 = vmatmul.mubr.bf16.gmra.mrb[0].mxu0 %v310
    %v399 = vpop.f32.mrb[0].mxu0
    %v400 = vadd.f32 %v315, %v399
    %v401 = vpop.f32.mrb[0].mxu0
    %v402 = vpop.f32.mrb[0].mxu0
    %v403 = vadd.f32 %v315, %v402
    %v404 = vpop.f32.mrb[0].mxu0
    %405 = vdwg.mxu0
    %v406 = vmax.f32 %v400, 0.0
    %v407 = vmax.f32 %v403, 0.0
    %v408 = vld [vmem:[%s8] sm:$0xf]
    %v409 = vld [vmem:[%s8 + $0x4] sm:$0xf]
    %v410 = vld [vmem:[%s8 + $0x8] sm:$0xf]
    %v411 = vld [vmem:[%s8 + $0xc] sm:$0xf]
    %v412 = vld [vmem:[%s8 + $0x10] sm:$0xf]
    %v413 = vld [vmem:[%s8 + $0x14] sm:$0xf]
    %v414 = vld [vmem:[%s8 + $0x18] sm:$0xf]
    %v415 = vld [vmem:[%s8 + $0x1c] sm:$0xf]
    %v416 = vld [vmem:[%s8 + $0x20] sm:$0xf]
    %v417 = vld [vmem:[%s8 + $0x24] sm:$0xf]
    %v418 = vld [vmem:[%s8 + $0x28] sm:$0xf]
    %v419 = vld [vmem:[%s8 + $0x2c] sm:$0xf]
    %v420 = vld [vmem:[%s8 + $0x30] sm:$0xf]
    %v421 = vld [vmem:[%s8 + $0x34] sm:$0xf]
    %v422 = vld [vmem:[%s8 + $0x38] sm:$0xf]
    %v423 = vld [vmem:[%s8 + $0x3c] sm:$0xf]
    %v424 = vld [vmem:[#allocation9] sm:$0x1]
    %v425 = vpack.c.bf16 %v407, %v406
    %v427 = vlaneseq
    %v428 = vshrl.u32 %v427, 7
    %v429 = vsub.s32 0, %v428
    %v430 = vrot.slane %v424, %v429
    %v448 = vunpack.c.l.b16 %v408
    %v449 = vunpack.c.l.b16 %v409
    %v450 = vunpack.c.l.b16 %v410
    %v451 = vunpack.c.l.b16 %v411
    %v452 = vunpack.c.l.b16 %v412
    %v453 = vunpack.c.l.b16 %v413
    %v454 = vunpack.c.l.b16 %v414
    %v455 = vunpack.c.l.b16 %v415
    %v456 = vunpack.c.l.b16 %v416
    %v457 = vunpack.c.l.b16 %v417
    %v458 = vunpack.c.l.b16 %v418
    %v459 = vunpack.c.l.b16 %v419
    %v460 = vunpack.c.l.b16 %v420
    %v461 = vunpack.c.l.b16 %v421
    %v462 = vunpack.c.l.b16 %v422
    %v463 = vunpack.c.l.b16 %v423
    %v464 = vpack.c.b16 %v449, %v448
    %v465 = vpack.c.b16 %v451, %v450
    %v466 = vpack.c.b16 %v453, %v452
    %v467 = vpack.c.b16 %v455, %v454
    %v468 = vpack.c.b16 %v457, %v456
    %v469 = vpack.c.b16 %v459, %v458
    %v470 = vpack.c.b16 %v461, %v460
    %v471 = vpack.c.b16 %v463, %v462
    %480 = vmatprep.subr.bf16.mxu0 0
    %481 = vmatpush1.bf16.msra.mxu0 %v464
    %482 = vmatprep.subr.bf16.mxu0 0
    %483 = vmatpush1.bf16.msra.mxu0 %v465
    %484 = vmatprep.subr.bf16.mxu0 0
    %485 = vmatpush1.bf16.msra.mxu0 %v466
    %486 = vmatprep.subr.bf16.mxu0 0
    %487 = vmatpush1.bf16.msra.mxu0 %v467
    %488 = vmatprep.subr.bf16.mxu0 0
    %489 = vmatpush1.bf16.msra.mxu0 %v468
    %490 = vmatprep.subr.bf16.mxu0 0
    %491 = vmatpush1.bf16.msra.mxu0 %v469
    %492 = vmatprep.subr.bf16.mxu0 0
    %493 = vmatpush1.bf16.msra.mxu0 %v470
    %494 = vmatprep.subr.bf16.mxu0 0
    %495 = vmatpush1.bf16.msra.mxu0 %v471
    %496 = vmatprep.subr.bf16.mxu0 0
    %497 = vmatpush1.bf16.msra.mxu0 0
    %498 = vmatprep.subr.bf16.mxu0 0
    %499 = vmatpush1.bf16.msra.mxu0 0
    %500 = vmatprep.subr.bf16.mxu0 0
    %501 = vmatpush1.bf16.msra.mxu0 0
    %502 = vmatprep.subr.bf16.mxu0 0
    %503 = vmatpush1.bf16.msra.mxu0 0
    %504 = vmatprep.subr.bf16.mxu0 0
    %505 = vmatpush1.bf16.msra.mxu0 0
    %506 = vmatprep.subr.bf16.mxu0 0
    %507 = vmatpush1.bf16.msra.mxu0 0
    %508 = vmatprep.subr.bf16.mxu0 0
    %509 = vmatpush1.bf16.msra.mxu0 0
    %510 = vmatprep.subr.bf16.mxu0 0
    %511 = vmatpush1.bf16.msra.mxu0 0
    %512 = vmatprep.mubr.bf16.mxu0 0
    %513 = vmatmul.mubr.bf16.gmra.mrb[0].mxu0 %v425
    %v514 = vpop.f32.mrb[0].mxu0
    %v515 = vadd.f32 %v430, %v514
    %v516 = vpop.f32.mrb[0].mxu0
    %v517 = vpop.f32.mrb[0].mxu0
    %v518 = vadd.f32 %v430, %v517
    %v519 = vpop.f32.mrb[0].mxu0
    %520 = vdwg.mxu0
    %vm521 = vcmask 64512
    %522 = vst.msk [vmem:[%s10] sm:$0xff] %vm521, %v515
    %523 = vst.msk [vmem:[%s10 + $0x8] sm:$0xff] %vm521, %v518
    // Predicated region
    $region62: #{discrim_forward.1} parent=1 // pred_check
      _
    $region63: #{discrim_forward.1} parent=1 // pred_check_branch
      %525 = sbr.rel (0) target = $region65
    $region64: #{discrim_forward.1} parent=1 // pred_region
      _
    $region65: #{discrim_forward.1} parent=1 // pred_fallthru
      _
    // Predicated region
    $region66: #{discrim_forward.1} parent=1 // pred_check
      _
    $region67: #{discrim_forward.1} parent=1 // pred_check_branch
      %527 = sbr.rel (0) target = $region69
    $region68: #{discrim_forward.1} parent=1 // pred_region
      _
    $region69: #{discrim_forward.1} parent=1 // pred_fallthru
      _
    %528 = vsyncpa [#allocation3], 1
    %529 = vsyncpa [#allocation5], 1
    %530 = vsyncpa [#allocation8], 1

</llo_original>
